<compile_context>
chip_gen: v6e
topology: v6e:2x2x1
jax: 0.10.0
libtpu: 0.0.40
codegen_flags: <defaults>
</compile_context>

<pallas_src>
import jax
import jax.numpy as jnp
from jax.experimental import pallas as pl
from jax.experimental.pallas import tpu as pltpu


_VMEM_LIMIT = 32 * 1024 * 1024   # safe scoped-VMEM on v5e/v6e (128 MiB) and v7x (64 MiB)
_BLOCK_BYTES = 2 << 20           # ~2 MiB per input block (dtype-aware row count)


# ----------------------------- kernels --------------------------------------

def _l1_none_kernel(p_ref, t_ref, o_ref):
    # Elementwise |pred - target| in the input dtype (bf16 stays bf16 on v6e/v7x).
    o_ref[...] = jnp.abs(p_ref[...] - t_ref[...]).astype(o_ref.dtype)


def _l1_none_w_kernel(p_ref, t_ref, w_ref, o_ref):
    o_ref[...] = (jnp.abs(p_ref[...] - t_ref[...]) * w_ref[...]).astype(o_ref.dtype)


def _l1_sum_kernel(p_ref, t_ref, acc_ref):
    """Accumulate sum(|pred - target|) into a resident (8, LANES) f32 output block."""
    k = pl.program_id(1)

    @pl.when(k == 0)
    def _():
        acc_ref[...] = jnp.zeros_like(acc_ref)

    d = jnp.abs(p_ref[...].astype(jnp.float32) - t_ref[...].astype(jnp.float32))
    # Fold the (tm, LANES) tile onto the (8, LANES) accumulator: the axis-0
    # reduction is a chain of plain VPU adds (no cross-lane XLU work, no SMEM).
    acc_ref[...] += jnp.sum(d.reshape(-1, 8, d.shape[-1]), axis=0)


def _l1_sum_w_kernel(p_ref, t_ref, w_ref, acc_ref, wacc_ref):
    """Accumulate sum(|pred - target| * w) and sum(w) in one pass over HBM."""
    k = pl.program_id(1)

    @pl.when(k == 0)
    def _():
        acc_ref[...] = jnp.zeros_like(acc_ref)
        wacc_ref[...] = jnp.zeros_like(wacc_ref)

    w = w_ref[...].astype(jnp.float32)
    d = jnp.abs(p_ref[...].astype(jnp.float32) - t_ref[...].astype(jnp.float32)) * w
    lanes = d.shape[-1]
    acc_ref[...] += jnp.sum(d.reshape(-1, 8, lanes), axis=0)
    wacc_ref[...] += jnp.sum(w.reshape(-1, 8, lanes), axis=0)


# ----------------------------- layout helpers -------------------------------

def _cdiv(a, b):
    return -(-a // b)


def _pick_layout(total, want_split, itemsize):
    """Choose (lanes, row_tile, padded_rows, nsplit, steps_per_split)."""
    # Lane-dense width: prefer 512, shrink for tiny tensors.
    lanes = 512
    while lanes > 128 and total < lanes * 8:
        lanes //= 2
    rows = _cdiv(total, lanes)
    rows = _cdiv(rows, 8) * 8                      # sublane multiple
    # Row tile: ~_BLOCK_BYTES per input block, multiple of 8, capped at the array.
    tm = max(8, (_BLOCK_BYTES // (lanes * itemsize)) // 8 * 8)
    tm = min(tm, rows)
    nsteps = _cdiv(rows, tm)
    nsplit = want_split if (want_split > 1 and nsteps >= want_split) else 1
    nsteps = _cdiv(nsteps, nsplit) * nsplit        # even per-split step count
    padded_rows = nsteps * tm
    return lanes, tm, padded_rows, nsplit, nsteps // nsplit


def _to_slab(x, total, padded_rows, lanes):
    flat = x.reshape(-1)
    pad = padded_rows * lanes - total
    if pad:
        flat = jnp.pad(flat, (0, pad))             # zero pad -> contributes 0 to sums
    return flat.reshape(padded_rows, lanes)


# ----------------------------- pallas wrappers -------------------------------

def _l1_none_pallas(slabs, lanes, tm):
    rows = slabs[0].shape[0]
    nsteps = rows // tm
    n_in = len(slabs)
    dtype = slabs[0].dtype
    itemsize = dtype.itemsize
    kern = _l1_none_kernel if n_in == 2 else _l1_none_w_kernel
    spec = pl.BlockSpec((tm, lanes), lambda i: (i, 0))
    return pl.pallas_call(
        kern,
        out_shape=jax.ShapeDtypeStruct((rows, lanes), dtype),
        grid=(nsteps,),
        in_specs=[spec] * n_in,
        out_specs=spec,
        compiler_params=pltpu.CompilerParams(
            dimension_semantics=("parallel",),
            vmem_limit_bytes=_VMEM_LIMIT),
        cost_estimate=pl.CostEstimate(
            flops=(n_in + 1) * rows * lanes,
            transcendentals=0,
            bytes_accessed=(n_in + 1) * rows * lanes * itemsize),
    )(*slabs)


def _l1_sum_pallas(slabs, lanes, tm, nsplit, steps_per_split):
    n_in = len(slabs)
    rows = slabs[0].shape[0]
    itemsize = slabs[0].dtype.itemsize

    in_spec = pl.BlockSpec((tm, lanes),
                           lambda s, k: (s * steps_per_split + k, 0))
    acc_spec = pl.BlockSpec((None, 8, lanes), lambda s, k: (s, 0, 0))
    acc_shape = jax.ShapeDtypeStruct((nsplit, 8, lanes), jnp.float32)

    if n_in == 2:
        kern, out_shape, out_specs = _l1_sum_kernel, acc_shape, acc_spec
    else:
        kern = _l1_sum_w_kernel
        out_shape = (acc_shape, acc_shape)
        out_specs = (acc_spec, acc_spec)

    out = pl.pallas_call(
        kern,
        out_shape=out_shape,
        grid=(nsplit, steps_per_split),
        in_specs=[in_spec] * n_in,
        out_specs=out_specs,
        compiler_params=pltpu.CompilerParams(
            dimension_semantics=("parallel", "arbitrary"),
            vmem_limit_bytes=_VMEM_LIMIT),
        cost_estimate=pl.CostEstimate(
            flops=2 * n_in * rows * lanes,
            transcendentals=0,
            bytes_accessed=n_in * rows * lanes * itemsize),
    )(*slabs)

    if n_in == 2:
        return jnp.sum(out)                       # scalar loss sum
    loss_partials, w_partials = out
    return jnp.sum(loss_partials), jnp.sum(w_partials)


# ----------------------------- module ----------------------------------------

class L1Loss:
    """L1 (MAE) loss matching mmsr's l1_loss / weight_reduce_loss semantics.

    forward(pred, target, weight=None):
      loss = |pred - target| (elementwise), optionally * weight
      reduction:
        'none': elementwise loss
        'sum' : sum of elementwise loss
        'mean': weight is None -> sum / numel
                weight given   -> sum / sum(broadcast weight)
                                  (== weight.sum() when weight has C channels,
                                   == weight.sum() * C when weight is single-channel,
                                   exactly mmsr's weight_reduce_loss)
      result is scaled by loss_weight.
    """

    def __init__(self, loss_weight=1.0, reduction='mean'):
        if reduction not in ['none', 'mean', 'sum']:
            raise ValueError(f'Unsupported reduction mode: {reduction}. '
                             f"Supported ones are: ['none', 'mean', 'sum']")
        self.loss_weight = loss_weight
        self.reduction = reduction

    def __call__(self, pred, target, weight=None):
        assert pred.shape == target.shape
        n, c, h, w = pred.shape
        total = n * c * h * w
        itemsize = jnp.dtype(pred.dtype).itemsize

        if weight is not None:
            # Allow (N, 1, H, W) broadcast weights; broadcasting first keeps the
            # mmsr 'mean' denominator semantics (sum of broadcast weight).
            weight = jnp.broadcast_to(weight.astype(pred.dtype), pred.shape)

        want_split = 1 if self.reduction == 'none' else 2
        lanes, tm, padded_rows, nsplit, spp = _pick_layout(total, want_split, itemsize)

        slabs = [_to_slab(pred, total, padded_rows, lanes),
                 _to_slab(target, total, padded_rows, lanes)]
        if weight is not None:
            slabs.append(_to_slab(weight, total, padded_rows, lanes))

        if self.reduction == 'none':
            out2d = _l1_none_pallas(slabs, lanes, tm)
            loss = out2d.reshape(-1)[:total].reshape(pred.shape)
            return self.loss_weight * loss

        if weight is None:
            loss_sum = _l1_sum_pallas(slabs, lanes, tm, nsplit, spp)
            if self.reduction == 'sum':
                return self.loss_weight * loss_sum
            return self.loss_weight * (loss_sum / jnp.float32(total))

        loss_sum, weight_sum = _l1_sum_pallas(slabs, lanes, tm, nsplit, spp)
        if self.reduction == 'sum':
            return self.loss_weight * loss_sum
        return self.loss_weight * (loss_sum / weight_sum)


# ----------------------------- demo -----------------------------------------

if __name__ == "__main__":
    key = jax.random.PRNGKey(0)
    k1, k2, k3 = jax.random.split(key, 3)

    N, C, H, W = 2, 4, 16, 16
    pred = jax.random.normal(k1, (N, C, H, W), dtype=jnp.float32)
    target = jax.random.normal(k2, (N, C, H, W), dtype=jnp.float32)
    weight = jax.random.uniform(k3, (N, C, H, W), dtype=jnp.float32)

    loss_mean = L1Loss(loss_weight=1.0, reduction='mean')(pred, target)
    loss_sum = L1Loss(loss_weight=1.0, reduction='sum')(pred, target)
    loss_none = L1Loss(loss_weight=1.0, reduction='none')(pred, target)
    loss_wnone = L1Loss(loss_weight=1.0, reduction='none')(pred, target, weight)
    loss_wsum = L1Loss(loss_weight=1.0, reduction='sum')(pred, target, weight)
    loss_wmean = L1Loss(loss_weight=1.0, reduction='mean')(pred, target, weight)

    jax.block_until_ready((loss_mean, loss_sum, loss_none,
                           loss_wnone, loss_wsum, loss_wmean))

    # reference checks in plain JAX
    ref_elem = jnp.abs(pred - target)
    assert jnp.allclose(loss_mean, ref_elem.mean(), rtol=1e-5, atol=1e-5)
    assert jnp.allclose(loss_sum, ref_elem.sum(), rtol=1e-5, atol=1e-4)
    assert jnp.allclose(loss_none, ref_elem, rtol=1e-5, atol=1e-6)
    assert jnp.allclose(loss_wnone, ref_elem * weight, rtol=1e-5, atol=1e-6)
    assert jnp.allclose(loss_wsum, (ref_elem * weight).sum(), rtol=1e-5, atol=1e-4)
    ref_wmean = (ref_elem * weight).sum() / weight.sum()
    assert jnp.allclose(loss_wmean, ref_wmean, rtol=1e-5, atol=1e-5)

    print("KERNEL_OK")
</pallas_src>

<mosaic_0001>
module attributes {stable_mosaic.version = 11 : i64} {
  func.func @_l1_sum_kernel(%arg0: i32, %arg1: i32, %arg2: memref<8x256xf32, #tpu.memory_space<vmem>>, %arg3: memref<8x256xf32, #tpu.memory_space<vmem>>, %arg4: memref<1x8x256xf32, #tpu.memory_space<vmem>>) attributes {dimension_semantics = [#tpu.dimension_semantics<parallel>, #tpu.dimension_semantics<arbitrary>], iteration_bounds = array<i64: 1, 1>, scalar_prefetch = 0 : i64, scratch_operands = 0 : i64, tpu.core_type = #tpu.core_type<tc>, window_params = [{transform_indices = @transform_0, window_bounds = array<i64: 8, 256>}, {transform_indices = @transform_1, window_bounds = array<i64: 8, 256>}, {transform_indices = @transform_2, window_bounds = array<i64: 1, 8, 256>}]} {
    %c0_i32 = arith.constant 0 : i32
    %0 = arith.cmpi eq, %arg1, %c0_i32 : i32
    %1 = arith.extui %0 : i1 to i32
    %c0_i32_0 = arith.constant 0 : i32
    %2 = arith.cmpi ne, %1, %c0_i32_0 : i32
    scf.if %2 {
      %cst_10 = arith.constant 0.000000e+00 : f32
      %15 = vector.broadcast %cst_10 : f32 to vector<8x256xf32>
      %c0_11 = arith.constant 0 : index
      %c0_12 = arith.constant 0 : index
      %c0_13 = arith.constant 0 : index
      %16 = vector.load %arg4[%c0_11, %c0_12, %c0_13] : memref<1x8x256xf32, #tpu.memory_space<vmem>>, vector<1x8x256xf32>
      %17 = vector.shape_cast %16 : vector<1x8x256xf32> to vector<8x256xf32>
      %18 = vector.shape_cast %15 : vector<8x256xf32> to vector<1x8x256xf32>
      tpu.vector_store %arg4[%c0_11, %c0_12, %c0_13], %18 {strides = array<i32>} : memref<1x8x256xf32, #tpu.memory_space<vmem>>, vector<1x8x256xf32>,
    } else {
    }
    %c0 = arith.constant 0 : index
    %c0_1 = arith.constant 0 : index
    %3 = vector.load %arg2[%c0, %c0_1] : memref<8x256xf32, #tpu.memory_space<vmem>>, vector<8x256xf32>
    %c0_2 = arith.constant 0 : index
    %c0_3 = arith.constant 0 : index
    %4 = vector.load %arg3[%c0_2, %c0_3] : memref<8x256xf32, #tpu.memory_space<vmem>>, vector<8x256xf32>
    %5 = arith.subf %3, %4 : vector<8x256xf32>
    %6 = math.absf %5 : vector<8x256xf32>
    %c0_4 = arith.constant 0 : index
    %c0_5 = arith.constant 0 : index
    %c0_6 = arith.constant 0 : index
    %7 = vector.load %arg4[%c0_4, %c0_5, %c0_6] : memref<1x8x256xf32, #tpu.memory_space<vmem>>, vector<1x8x256xf32>
    %8 = vector.shape_cast %7 : vector<1x8x256xf32> to vector<8x256xf32>
    %9 = vector.shape_cast %6 : vector<8x256xf32> to vector<1x8x256xf32>
    %cst = arith.constant dense<0.000000e+00> : vector<8x256xf32>
    %10 = vector.multi_reduction <add>, %9, %cst [0] : vector<1x8x256xf32> to vector<8x256xf32>
    %11 = arith.addf %8, %10 : vector<8x256xf32>
    %c0_7 = arith.constant 0 : index
    %c0_8 = arith.constant 0 : index
    %c0_9 = arith.constant 0 : index
    %12 = vector.load %arg4[%c0_7, %c0_8, %c0_9] : memref<1x8x256xf32, #tpu.memory_space<vmem>>, vector<1x8x256xf32>
    %13 = vector.shape_cast %12 : vector<1x8x256xf32> to vector<8x256xf32>
    %14 = vector.shape_cast %11 : vector<8x256xf32> to vector<1x8x256xf32>
    tpu.vector_store %arg4[%c0_7, %c0_8, %c0_9], %14 {strides = array<i32>} : memref<1x8x256xf32, #tpu.memory_space<vmem>>, vector<1x8x256xf32>,
    return
  }
  func.func @transform_0(%arg0: i32, %arg1: i32) -> (i32, i32) {
    %c1_i32 = arith.constant 1 : i32
    %0 = arith.muli %arg0, %c1_i32 : i32
    %1 = arith.addi %0, %arg1 : i32
    %c0_i32 = arith.constant 0 : i32
    %c0_i32_0 = arith.constant 0 : i32
    return %1, %c0_i32 : i32, i32
  }
  func.func @transform_1(%arg0: i32, %arg1: i32) -> (i32, i32) {
    %c1_i32 = arith.constant 1 : i32
    %0 = arith.muli %arg0, %c1_i32 : i32
    %1 = arith.addi %0, %arg1 : i32
    %c0_i32 = arith.constant 0 : i32
    %c0_i32_0 = arith.constant 0 : i32
    return %1, %c0_i32 : i32, i32
  }
  func.func @transform_2(%arg0: i32, %arg1: i32) -> (i32, i32, i32) {
    %c0_i32 = arith.constant 0 : i32
    %c0_i32_0 = arith.constant 0 : i32
    %c0_i32_1 = arith.constant 0 : i32
    return %arg0, %c0_i32, %c0_i32_0 : i32, i32, i32
  }
}

</mosaic_0001>

<llo_original>
// kernel: tpu_custom_call.1
$region0: #{tpu_custom_call.1}
  #allocation0 [shape = 'u32[]', space=smem, size = 0x4, offset = 0x4, fixed_abs, tag = 'smem constant byte address 0x4 - core index']
  #allocation1 [shape = 'u32[144,128]{1,0:T(1,128)}', space=vmem, size = 0x12000, scoped, tag = 'internal scratch']
  %s0 = inlined_call_operand.hbm [shape: f32[8,256], index: 0, kind: input, shape index: {}]
  %s1 = inlined_call_operand.hbm [shape: f32[8,256], index: 1, kind: input, shape index: {}]
  %s2 = inlined_call_operand.hbm [shape: f32[1,8,256], index: 2, kind: output, shape index: {}]
  %s3 = sld [smem:[#allocation0]]
  $region30: #{tpu_custom_call.1} parent=0
    _
  %s5 = ssub.s32 1, %s3
  %s6 = scalar_select 0, %s5, %s3
  $region1: #{tpu_custom_call.1} parent=0
    #allocation2 [shape = 'u8[8192]{0}', space=vmem, size = 0x2000, scoped, tag = 'input window, operand 0, single buffered']
    #allocation3 [shape = 's32[1]{0}', space=sflag, size = 0x4, scoped, tag = 'scoped memory for tpu_custom_call.1']
    #allocation4 [shape = 's32[1]{0}', space=sflag, size = 0x4, scoped, tag = 'scoped memory for tpu_custom_call.1']
    #allocation5 [shape = 'u8[8192]{0}', space=vmem, size = 0x2000, scoped, tag = 'input window, operand 1, single buffered']
    #allocation6 [shape = 's32[1]{0}', space=sflag, size = 0x4, scoped, tag = 'scoped memory for tpu_custom_call.1']
    #allocation7 [shape = 'u8[8192]{0}', space=vmem, size = 0x2000, scoped, tag = 'output window, operand 0, single buffered']
    %7 = vsyncpa [#allocation3], 0
    %8 = vsyncpa [#allocation6], 0
    %9 = vsyncpa [#allocation4], 0
    // Predicated region
    $region2: #{tpu_custom_call.1} parent=1 // pred_check
      _
    $region3: #{tpu_custom_call.1} parent=1 // pred_check_branch
      %11 = sbr.rel (0) target = $region5
    $region4: #{tpu_custom_call.1} parent=1 // pred_region
      %s12 = sadd.s32 0, 0
      %s14 = ssub.s32 256, 256
      %15 = vsyncadd [#allocation3], %s14
      %s16 = smul.addr %s12, 2
      %s17 = smul.addr %s16, 128
      %s18 = scalar_lea.hbm %s0, %s17
      %s20 = sshll.u32 [#allocation2], 4
      %s21 = int_to_ptr.vmem [resolvable:$true] %s20
      %23 = dma.hbm_to_vmem [thread:$0]  %s18, 256, %s21, [#allocation3]
    $region5: #{tpu_custom_call.1} parent=1 // pred_fallthru
      _
    // Predicated region
    $region6: #{tpu_custom_call.1} parent=1 // pred_check
      _
    $region7: #{tpu_custom_call.1} parent=1 // pred_check_branch
      %25 = sbr.rel (0) target = $region9
    $region8: #{tpu_custom_call.1} parent=1 // pred_region
      %s26 = sadd.s32 0, 0
      %s28 = ssub.s32 256, 256
      %29 = vsyncadd [#allocation6], %s28
      %s30 = smul.addr %s26, 2
      %s31 = smul.addr %s30, 128
      %s32 = scalar_lea.hbm %s1, %s31
      %s34 = sshll.u32 [#allocation5], 4
      %s35 = int_to_ptr.vmem [resolvable:$true] %s34
      %37 = dma.hbm_to_vmem [thread:$0]  %s32, 256, %s35, [#allocation6]
    $region9: #{tpu_custom_call.1} parent=1 // pred_fallthru
      _
    // Predicated region
    $region10: #{tpu_custom_call.1} parent=1 // pred_check
      _
    $region11: #{tpu_custom_call.1} parent=1 // pred_check_branch
      %39 = sbr.rel (0) target = $region13
    $region12: #{tpu_custom_call.1} parent=1 // pred_region
      %40 = dma.done [#allocation3], 256
    $region13: #{tpu_custom_call.1} parent=1 // pred_fallthru
      _
    // Predicated region
    $region14: #{tpu_custom_call.1} parent=1 // pred_check
      _
    $region15: #{tpu_custom_call.1} parent=1 // pred_check_branch
      %42 = sbr.rel (0) target = $region17
    $region16: #{tpu_custom_call.1} parent=1 // pred_region
      %43 = dma.done [#allocation6], 256
    $region17: #{tpu_custom_call.1} parent=1 // pred_fallthru
      _
    %s44 = sadd.s32 0, 0
    %s45 = sadd.s32 0, 0
    %p46 = scmp.eq.s32.totalorder 0, 0
    // Predicated region
    $region18: #{tpu_custom_call.1} parent=1 // pred_check
      %p47 = pneg %p46
    $region19: #{tpu_custom_call.1} parent=1 // pred_check_branch
      %49 = sbr.rel (%p47) target = $region21
    $region20: #{tpu_custom_call.1} parent=1 // pred_region
      %50 = vst [vmem:[#allocation7] sm:$0xff] 0.0
      %51 = vst [vmem:[#allocation7 + $0x8] sm:$0xff] 0.0
    $region21: #{tpu_custom_call.1} parent=1 // pred_fallthru
      _
    %v52 = vld [vmem:[#allocation2] sm:$0xff]
    %v53 = vld [vmem:[#allocation2 + $0x8] sm:$0xff]
    %v54 = vld [vmem:[#allocation5] sm:$0xff]
    %v55 = vld [vmem:[#allocation5 + $0x8] sm:$0xff]
    %v56 = vsub.f32 %v52, %v54
    %v57 = vsub.f32 %v53, %v55
    %v58 = vand.u32 2147483647, %v56
    %v59 = vand.u32 2147483647, %v57
    %v60 = vld [vmem:[#allocation7] sm:$0xff]
    %v61 = vld [vmem:[#allocation7 + $0x8] sm:$0xff]
    %v62 = vadd.f32 %v58, 0.0
    %v63 = vadd.f32 %v59, 0.0
    %v64 = vadd.f32 %v60, %v62
    %v65 = vadd.f32 %v61, %v63
    %66 = vst [vmem:[#allocation7] sm:$0xff] %v64
    %67 = vst [vmem:[#allocation7 + $0x8] sm:$0xff] %v65
    // Predicated region
    $region22: #{tpu_custom_call.1} parent=1 // pred_check
      _
    $region23: #{tpu_custom_call.1} parent=1 // pred_check_branch
      %69 = sbr.rel (0) target = $region25
    $region24: #{tpu_custom_call.1} parent=1 // pred_region
      %s71 = ssub.s32 256, 256
      %72 = vsyncadd [#allocation4], %s71
      %s74 = sshll.u32 [#allocation7], 4
      %s75 = int_to_ptr.vmem [resolvable:$true] %s74
      %77 = dma.vmem_to_hbm [thread:$0]  %s75, 256, %s2, [#allocation4]
    $region25: #{tpu_custom_call.1} parent=1 // pred_fallthru
      _
    // Predicated region
    $region26: #{tpu_custom_call.1} parent=1 // pred_check
      _
    $region27: #{tpu_custom_call.1} parent=1 // pred_check_branch
      %79 = sbr.rel (0) target = $region29
    $region28: #{tpu_custom_call.1} parent=1 // pred_region
      %80 = dma.done [#allocation4], 256
    $region29: #{tpu_custom_call.1} parent=1 // pred_fallthru
      _
    %81 = vsyncpa [#allocation3], 1
    %82 = vsyncpa [#allocation6], 1
    %83 = vsyncpa [#allocation4], 1

</llo_original>
